<compile_context>
chip_gen: v5e
topology: v5e:2x2
jax: 0.10.0
libtpu: 0.0.40
codegen_flags: <defaults>
</compile_context>

<pallas_src>
import functools

import jax
import jax.numpy as jnp
from jax.experimental import pallas as pl
from jax.experimental.pallas import tpu as pltpu


def _round_up(x, m):
    return ((x + m - 1) // m) * m


def _wce_kernel(w_ref, x_ref, t_ref, loss_out_ref, wsum_out_ref,
                loss_acc, wsum_acc, *, tile_n, tiles_per_core, n_samples):
    # w_ref        : (C, 1)  f32       -- global class weights, resident across grid
    # x_ref        : (C, T)  f32/bf16  -- logits tile (classes on sublanes, samples on lanes)
    # t_ref        : (1, T)  i32       -- targets tile
    # loss_out_ref : (1, 1)  f32       -- per-core sum_i w_i * nll_i
    # wsum_out_ref : (1, 1)  f32       -- per-core sum_i w_i
    # loss_acc, wsum_acc : (1, T) f32 VMEM lane-partial accumulators
    core = pl.program_id(0)
    step = pl.program_id(1)

    @pl.when(step == 0)
    def _init():
        loss_acc[...] = jnp.zeros_like(loss_acc)
        wsum_acc[...] = jnp.zeros_like(wsum_acc)

    # Global sample index of every lane in this tile.  Lanes past n_samples
    # (ragged tail, or a whole duplicated tile from index-map clamping) are
    # invalid and must contribute exactly zero.
    g = core * tiles_per_core + step            # global tile index
    start = g * tile_n
    lane = jax.lax.broadcasted_iota(jnp.int32, (1, tile_n), 1)
    valid = (lane + start) < n_samples          # (1, T) bool

    # upcast (supports bf16 logits), clamp(-100, 100), neutralize invalid lanes
    x = jnp.clip(x_ref[...].astype(jnp.float32), -100.0, 100.0)      # (C, T)
    x = jnp.where(valid, x, 0.0)                # finite everywhere -> safe exp/log

    t = t_ref[...]                                                    # (1, T)
    cls = jax.lax.broadcasted_iota(jnp.int32, x.shape, 0)             # (C, T)
    onehot = cls == t                                                 # (C, T)

    # numerically-stable logsumexp over the class (sublane) axis
    m = jnp.max(x, axis=0, keepdims=True)                             # (1, T)
    lse = m + jnp.log(jnp.sum(jnp.exp(x - m), axis=0, keepdims=True))

    # target logit and per-sample class weight via masked sublane sums
    tgt_logit = jnp.sum(jnp.where(onehot, x, 0.0), axis=0, keepdims=True)         # (1, T)
    w_i = jnp.sum(jnp.where(onehot, w_ref[...], 0.0), axis=0, keepdims=True)      # (1, T)
    w_i = jnp.where(valid, w_i, 0.0)

    loss_acc[...] += w_i * (lse - tgt_logit)    # lane-partial accumulation
    wsum_acc[...] += w_i

    @pl.when(step == pl.num_programs(1) - 1)
    def _finalize():
        loss_out_ref[...] = jnp.sum(loss_acc[...], axis=1, keepdims=True)
        wsum_out_ref[...] = jnp.sum(wsum_acc[...], axis=1, keepdims=True)


@functools.partial(jax.jit, static_argnames=("num_classes", "tile_n"))
def weighted_cross_entropy_loss(logits, targets, num_classes=3, tile_n=2048):
    """logits: (N, C) float32/bfloat16, targets: (N,) int. Returns scalar f32 loss."""
    if isinstance(logits, dict):
        logits = logits["logits"]
    eps = 1e-8
    N, C = logits.shape
    assert C == num_classes
    assert tile_n % 128 == 0
    targets = targets.astype(jnp.int32)

    # ---- global class weights (counts over ALL of N, computed once) --------
    # compare-and-reduce instead of jnp.bincount (no scatter/sort lowering).
    counts = jnp.sum(
        (targets[:, None] == jnp.arange(num_classes, dtype=jnp.int32)[None, :]
         ).astype(jnp.float32), axis=0)                               # (C,)
    total = counts.sum()
    w = total / (counts + eps)
    w = (w / w.sum()).reshape(num_classes, 1).astype(jnp.float32)     # (C, 1)

    # ---- lane-dense layout: (C, N), batch on the 128-lane axis -------------
    x_t = logits.T                                                    # (C, N)
    t_row = targets.reshape(1, N)                                     # (1, N)

    # ---- tile / grid geometry (no jnp.pad: tail handled in-kernel) ---------
    tile = min(tile_n, _round_up(N, 128))        # cap tile width for tiny N
    n_tiles = pl.cdiv(N, tile)
    num_cores = 2 if n_tiles >= 2 else 1         # v7x: split N across both TCs
    tiles_per_core = pl.cdiv(n_tiles, num_cores)
    last_tile = n_tiles - 1

    # Clamp the block index so a core's extra (duplicate) tile stays in-bounds;
    # its contribution is zeroed in-kernel via the global-sample-index mask.
    def data_map(c, i):
        return (0, jnp.minimum(c * tiles_per_core + i, last_tile))

    kernel = functools.partial(_wce_kernel, tile_n=tile,
                               tiles_per_core=tiles_per_core, n_samples=N)

    loss_parts, wsum_parts = pl.pallas_call(
        kernel,
        out_shape=(jax.ShapeDtypeStruct((num_cores, 1), jnp.float32),
                   jax.ShapeDtypeStruct((num_cores, 1), jnp.float32)),
        grid_spec=pltpu.PrefetchScalarGridSpec(
            num_scalar_prefetch=0,
            grid=(num_cores, tiles_per_core),
            in_specs=[
                pl.BlockSpec((num_classes, 1), lambda c, i: (0, 0)),   # weights (resident)
                pl.BlockSpec((num_classes, tile), data_map),           # logits^T tile
                pl.BlockSpec((1, tile), data_map),                     # targets tile
            ],
            out_specs=[
                pl.BlockSpec((1, 1), lambda c, i: (c, 0)),             # per-core loss sum
                pl.BlockSpec((1, 1), lambda c, i: (c, 0)),             # per-core weight sum
            ],
            scratch_shapes=[
                pltpu.VMEM((1, tile), jnp.float32),   # lane-partial loss accumulator
                pltpu.VMEM((1, tile), jnp.float32),   # lane-partial weight accumulator
            ],
        ),
        compiler_params=pltpu.CompilerParams(
            dimension_semantics=("parallel", "arbitrary"),
            # NOTE: for large-C reuse, size tile so 2*C*tile*4B stays well under
            # the per-generation VMEM limit (v7x: 64 MiB physical) and/or raise
            # vmem_limit_bytes here.
        ),
    )(w, x_t, t_row)

    # single tiny scalar combine (also merges the two per-core partial sums)
    return loss_parts.sum() / wsum_parts.sum()


def _reference(logits, targets, num_classes=3, eps=1e-8):
    # pure-JAX reference mirroring the PyTorch module, for sanity checking
    x = jnp.clip(logits.astype(jnp.float32), -100.0, 100.0)
    counts = jnp.bincount(targets, length=num_classes).astype(jnp.float32)
    total = counts.sum()
    w = total / (counts + eps)
    w = w / w.sum()
    logp = x - jax.scipy.special.logsumexp(x, axis=-1, keepdims=True)
    nll = -jnp.take_along_axis(logp, targets[:, None], axis=-1)[:, 0]
    w_i = w[targets]
    return jnp.sum(w_i * nll) / jnp.sum(w_i)


if __name__ == "__main__":
    key = jax.random.PRNGKey(0)

    cases = [
        (512, 3, 2048),   # single wide tile (default width, capped to N)
        (512, 3, 128),    # multi-tile + 2-way core split, exact tiling
        (450, 3, 128),    # ragged last tile handled in-kernel (no wrapper pad)
        (300, 3, 128),    # odd tile count -> clamped duplicate tile masked out
    ]
    for n, c, tn in cases:
        k1, k2, key = jax.random.split(key, 3)
        logits = jax.random.normal(k1, (n, c), dtype=jnp.float32) * 5.0
        targets = jax.random.randint(k2, (n,), 0, c, dtype=jnp.int32)

        loss = jax.block_until_ready(
            weighted_cross_entropy_loss(logits, targets, num_classes=c, tile_n=tn))
        ref = jax.block_until_ready(_reference(logits, targets, num_classes=c))
        assert jnp.allclose(loss, ref, rtol=1e-4, atol=1e-5), (n, c, tn, loss, ref)

    print("KERNEL_OK")
</pallas_src>

<mosaic_0001>
module attributes {stable_mosaic.version = 11 : i64} {
  func.func @_wce_kernel(%arg0: i32, %arg1: i32, %arg2: memref<3x1xf32, #tpu.memory_space<vmem>>, %arg3: memref<3x512xf32, #tpu.memory_space<vmem>>, %arg4: memref<1x512xi32, #tpu.memory_space<vmem>>, %arg5: memref<1x1xf32, #tpu.memory_space<vmem>>, %arg6: memref<1x1xf32, #tpu.memory_space<vmem>>, %arg7: memref<1x512xf32, #tpu.memory_space<vmem>>, %arg8: memref<1x512xf32, #tpu.memory_space<vmem>>) attributes {dimension_semantics = [#tpu.dimension_semantics<parallel>, #tpu.dimension_semantics<arbitrary>], iteration_bounds = array<i64: 1, 1>, scalar_prefetch = 0 : i64, scratch_operands = 2 : i64, tpu.core_type = #tpu.core_type<tc>, window_params = [{pipeline_mode = #tpu.pipeline_mode<synchronous>, transform_indices = @transform_0, window_bounds = array<i64: 3, 1>}, {transform_indices = @transform_1, window_bounds = array<i64: 3, 512>}, {transform_indices = @transform_2, window_bounds = array<i64: 1, 512>}, {transform_indices = @transform_3, window_bounds = array<i64: 1, 1>}, {transform_indices = @transform_4, window_bounds = array<i64: 1, 1>}]} {
    %c0_i32 = arith.constant 0 : i32
    %0 = arith.cmpi eq, %arg1, %c0_i32 : i32
    %1 = arith.extui %0 : i1 to i32
    %c0_i32_0 = arith.constant 0 : i32
    %2 = arith.cmpi ne, %1, %c0_i32_0 : i32
    scf.if %2 {
      %cst_26 = arith.constant 0.000000e+00 : f32
      %57 = vector.broadcast %cst_26 : f32 to vector<1x512xf32>
      %c0_27 = arith.constant 0 : index
      %c0_28 = arith.constant 0 : index
      %58 = vector.load %arg7[%c0_27, %c0_28] : memref<1x512xf32, #tpu.memory_space<vmem>>, vector<1x512xf32>
      tpu.vector_store %arg7[%c0_27, %c0_28], %57 {strides = array<i32>} : memref<1x512xf32, #tpu.memory_space<vmem>>, vector<1x512xf32>,
      %cst_29 = arith.constant 0.000000e+00 : f32
      %59 = vector.broadcast %cst_29 : f32 to vector<1x512xf32>
      %c0_30 = arith.constant 0 : index
      %c0_31 = arith.constant 0 : index
      %60 = vector.load %arg8[%c0_30, %c0_31] : memref<1x512xf32, #tpu.memory_space<vmem>>, vector<1x512xf32>
      tpu.vector_store %arg8[%c0_30, %c0_31], %59 {strides = array<i32>} : memref<1x512xf32, #tpu.memory_space<vmem>>, vector<1x512xf32>,
    } else {
    }
    %c1_i32 = arith.constant 1 : i32
    %3 = arith.muli %arg0, %c1_i32 : i32
    %4 = arith.addi %3, %arg1 : i32
    %c512_i32 = arith.constant 512 : i32
    %5 = arith.muli %4, %c512_i32 : i32
    %6 = tpu.iota {dimensions = array<i32: 1>} : vector<1x512xi32>
    %7 = vector.broadcast %5 : i32 to vector<1x512xi32>
    %8 = arith.addi %6, %7 : vector<1x512xi32>
    %c512_i32_1 = arith.constant 512 : i32
    %9 = vector.broadcast %c512_i32_1 : i32 to vector<1x512xi32>
    %10 = arith.cmpi slt, %8, %9 : vector<1x512xi32>
    %c0 = arith.constant 0 : index
    %c0_2 = arith.constant 0 : index
    %11 = vector.load %arg3[%c0, %c0_2] : memref<3x512xf32, #tpu.memory_space<vmem>>, vector<3x512xf32>
    %cst = arith.constant -1.000000e+02 : f32
    %cst_3 = arith.constant 1.000000e+02 : f32
    %12 = vector.broadcast %cst : f32 to vector<3x512xf32>
    %13 = arith.maximumf %12, %11 : vector<3x512xf32>
    %14 = vector.broadcast %cst_3 : f32 to vector<3x512xf32>
    %15 = arith.minimumf %14, %13 : vector<3x512xf32>
    %cst_4 = arith.constant 0.000000e+00 : f32
    %16 = vector.shape_cast %10 : vector<1x512xi1> to vector<1x512xi1>
    %17 = vector.broadcast %16 : vector<1x512xi1> to vector<3x512xi1>
    %18 = vector.broadcast %cst_4 : f32 to vector<3x512xf32>
    %19 = arith.select %17, %15, %18 : vector<3x512xi1>, vector<3x512xf32>
    %c0_5 = arith.constant 0 : index
    %c0_6 = arith.constant 0 : index
    %20 = vector.load %arg4[%c0_5, %c0_6] : memref<1x512xi32, #tpu.memory_space<vmem>>, vector<1x512xi32>
    %21 = tpu.iota {dimensions = array<i32: 0>} : vector<3x512xi32>
    %22 = vector.broadcast %20 : vector<1x512xi32> to vector<3x512xi32>
    %23 = arith.cmpi eq, %21, %22 : vector<3x512xi32>
    %cst_7 = arith.constant dense<0xFF800000> : vector<512xf32>
    %24 = vector.multi_reduction <maximumf>, %19, %cst_7 [0] : vector<3x512xf32> to vector<512xf32>
    %25 = vector.shape_cast %24 : vector<512xf32> to vector<1x512xf32>
    %26 = vector.broadcast %25 : vector<1x512xf32> to vector<3x512xf32>
    %27 = arith.subf %19, %26 : vector<3x512xf32>
    %28 = math.exp %27 : vector<3x512xf32>
    %cst_8 = arith.constant dense<0.000000e+00> : vector<512xf32>
    %29 = vector.multi_reduction <add>, %28, %cst_8 [0] : vector<3x512xf32> to vector<512xf32>
    %30 = vector.shape_cast %29 : vector<512xf32> to vector<1x512xf32>
    %31 = math.log %30 : vector<1x512xf32>
    %32 = arith.addf %25, %31 : vector<1x512xf32>
    %cst_9 = arith.constant 0.000000e+00 : f32
    %33 = vector.broadcast %cst_9 : f32 to vector<3x512xf32>
    %34 = arith.select %23, %19, %33 : vector<3x512xi1>, vector<3x512xf32>
    %cst_10 = arith.constant dense<0.000000e+00> : vector<512xf32>
    %35 = vector.multi_reduction <add>, %34, %cst_10 [0] : vector<3x512xf32> to vector<512xf32>
    %36 = vector.shape_cast %35 : vector<512xf32> to vector<1x512xf32>
    %c0_11 = arith.constant 0 : index
    %c0_12 = arith.constant 0 : index
    %37 = vector.load %arg2[%c0_11, %c0_12] : memref<3x1xf32, #tpu.memory_space<vmem>>, vector<3x1xf32>
    %cst_13 = arith.constant 0.000000e+00 : f32
    %38 = vector.shape_cast %37 : vector<3x1xf32> to vector<3x1xf32>
    %39 = vector.broadcast %38 : vector<3x1xf32> to vector<3x512xf32>
    %40 = vector.broadcast %cst_13 : f32 to vector<3x512xf32>
    %41 = arith.select %23, %39, %40 : vector<3x512xi1>, vector<3x512xf32>
    %cst_14 = arith.constant dense<0.000000e+00> : vector<512xf32>
    %42 = vector.multi_reduction <add>, %41, %cst_14 [0] : vector<3x512xf32> to vector<512xf32>
    %43 = vector.shape_cast %42 : vector<512xf32> to vector<1x512xf32>
    %cst_15 = arith.constant 0.000000e+00 : f32
    %44 = vector.broadcast %cst_15 : f32 to vector<1x512xf32>
    %45 = arith.select %10, %43, %44 : vector<1x512xi1>, vector<1x512xf32>
    %c0_16 = arith.constant 0 : index
    %c0_17 = arith.constant 0 : index
    %46 = vector.load %arg7[%c0_16, %c0_17] : memref<1x512xf32, #tpu.memory_space<vmem>>, vector<1x512xf32>
    %47 = arith.subf %32, %36 : vector<1x512xf32>
    %48 = arith.mulf %45, %47 : vector<1x512xf32>
    %49 = arith.addf %46, %48 : vector<1x512xf32>
    %c0_18 = arith.constant 0 : index
    %c0_19 = arith.constant 0 : index
    %50 = vector.load %arg7[%c0_18, %c0_19] : memref<1x512xf32, #tpu.memory_space<vmem>>, vector<1x512xf32>
    tpu.vector_store %arg7[%c0_18, %c0_19], %49 {strides = array<i32>} : memref<1x512xf32, #tpu.memory_space<vmem>>, vector<1x512xf32>,
    %c0_20 = arith.constant 0 : index
    %c0_21 = arith.constant 0 : index
    %51 = vector.load %arg8[%c0_20, %c0_21] : memref<1x512xf32, #tpu.memory_space<vmem>>, vector<1x512xf32>
    %52 = arith.addf %51, %45 : vector<1x512xf32>
    %c0_22 = arith.constant 0 : index
    %c0_23 = arith.constant 0 : index
    %53 = vector.load %arg8[%c0_22, %c0_23] : memref<1x512xf32, #tpu.memory_space<vmem>>, vector<1x512xf32>
    tpu.vector_store %arg8[%c0_22, %c0_23], %52 {strides = array<i32>} : memref<1x512xf32, #tpu.memory_space<vmem>>, vector<1x512xf32>,
    %c0_i32_24 = arith.constant 0 : i32
    %54 = arith.cmpi eq, %arg1, %c0_i32_24 : i32
    %55 = arith.extui %54 : i1 to i32
    %c0_i32_25 = arith.constant 0 : i32
    %56 = arith.cmpi ne, %55, %c0_i32_25 : i32
    scf.if %56 {
      %c0_26 = arith.constant 0 : index
      %c0_27 = arith.constant 0 : index
      %57 = vector.load %arg7[%c0_26, %c0_27] : memref<1x512xf32, #tpu.memory_space<vmem>>, vector<1x512xf32>
      %cst_28 = arith.constant dense<0.000000e+00> : vector<1xf32>
      %58 = vector.multi_reduction <add>, %57, %cst_28 [1] : vector<1x512xf32> to vector<1xf32>
      %59 = vector.shape_cast %58 : vector<1xf32> to vector<1x1xf32>
      %c0_29 = arith.constant 0 : index
      %c0_30 = arith.constant 0 : index
      %60 = vector.load %arg5[%c0_29, %c0_30] : memref<1x1xf32, #tpu.memory_space<vmem>>, vector<1x1xf32>
      tpu.vector_store %arg5[%c0_29, %c0_30], %59 {strides = array<i32>} : memref<1x1xf32, #tpu.memory_space<vmem>>, vector<1x1xf32>,
      %c0_31 = arith.constant 0 : index
      %c0_32 = arith.constant 0 : index
      %61 = vector.load %arg8[%c0_31, %c0_32] : memref<1x512xf32, #tpu.memory_space<vmem>>, vector<1x512xf32>
      %cst_33 = arith.constant dense<0.000000e+00> : vector<1xf32>
      %62 = vector.multi_reduction <add>, %61, %cst_33 [1] : vector<1x512xf32> to vector<1xf32>
      %63 = vector.shape_cast %62 : vector<1xf32> to vector<1x1xf32>
      %c0_34 = arith.constant 0 : index
      %c0_35 = arith.constant 0 : index
      %64 = vector.load %arg6[%c0_34, %c0_35] : memref<1x1xf32, #tpu.memory_space<vmem>>, vector<1x1xf32>
      tpu.vector_store %arg6[%c0_34, %c0_35], %63 {strides = array<i32>} : memref<1x1xf32, #tpu.memory_space<vmem>>, vector<1x1xf32>,
    } else {
    }
    return
  }
  func.func @transform_0(%arg0: i32, %arg1: i32) -> (i32, i32) {
    %c0_i32 = arith.constant 0 : i32
    %c0_i32_0 = arith.constant 0 : i32
    %c0_i32_1 = arith.constant 0 : i32
    return %c0_i32, %c0_i32_0 : i32, i32
  }
  func.func @transform_1(%arg0: i32, %arg1: i32) -> (i32, i32) {
    %c1_i32 = arith.constant 1 : i32
    %0 = arith.muli %arg0, %c1_i32 : i32
    %1 = arith.addi %0, %arg1 : i32
    %c0_i32 = arith.constant 0 : i32
    %2 = arith.minsi %1, %c0_i32 : i32
    %c0_i32_0 = arith.constant 0 : i32
    %c0_i32_1 = arith.constant 0 : i32
    return %c0_i32_0, %2 : i32, i32
  }
  func.func @transform_2(%arg0: i32, %arg1: i32) -> (i32, i32) {
    %c1_i32 = arith.constant 1 : i32
    %0 = arith.muli %arg0, %c1_i32 : i32
    %1 = arith.addi %0, %arg1 : i32
    %c0_i32 = arith.constant 0 : i32
    %2 = arith.minsi %1, %c0_i32 : i32
    %c0_i32_0 = arith.constant 0 : i32
    %c0_i32_1 = arith.constant 0 : i32
    return %c0_i32_0, %2 : i32, i32
  }
  func.func @transform_3(%arg0: i32, %arg1: i32) -> (i32, i32) {
    %c0_i32 = arith.constant 0 : i32
    %c0_i32_0 = arith.constant 0 : i32
    return %arg0, %c0_i32 : i32, i32
  }
  func.func @transform_4(%arg0: i32, %arg1: i32) -> (i32, i32) {
    %c0_i32 = arith.constant 0 : i32
    %c0_i32_0 = arith.constant 0 : i32
    return %arg0, %c0_i32 : i32, i32
  }
}

</mosaic_0001>

<llo_original>
// kernel: weighted_cross_entropy_loss.1
$region0: #{weighted_cross_entropy_loss.1}
  #allocation0 [shape = 'u32[]', space=smem, size = 0x4, offset = 0x4, fixed_abs, tag = 'smem constant byte address 0x4 - core index']
  #allocation1 [shape = 'u32[72,128]{1,0:T(1,128)}', space=vmem, size = 0x9000, scoped, tag = 'internal scratch']
  #allocation2 [shape = 'f32[1,512]{1,0:T(1,128)}', space=vmem, size = 0x800, scoped, tag = 'scratch operand']
  #allocation3 [shape = 'f32[1,512]{1,0:T(1,128)}', space=vmem, size = 0x800, scoped, tag = 'scratch operand']
  %s0 = inlined_call_operand.vmem [shape: f32[3,1], index: 0, kind: input, shape index: {}]
  %s1 = inlined_call_operand.vmem [shape: f32[3,512], index: 1, kind: input, shape index: {}]
  %s2 = inlined_call_operand.vmem [shape: s32[1,512], index: 2, kind: input, shape index: {}]
  %s3 = inlined_call_operand.hbm [shape: f32[1,1], index: 3, kind: output, shape index: {0}]
  %s4 = inlined_call_operand.hbm [shape: f32[1,1], index: 4, kind: output, shape index: {1}]
  %5 = xla_tuple %s3, %s4
  %s6 = sld [smem:[#allocation0]]
  $region38: #{weighted_cross_entropy_loss.1} parent=0
    _
  %s8 = ssub.s32 1, %s6
  %s9 = scalar_select 0, %s8, %s6
  $region1: #{weighted_cross_entropy_loss.1} parent=0
    #allocation4 [shape = 'u8[512]{0}', space=vmem, size = 0x400, scoped, tag = 'output window, operand 0, single buffered']
    #allocation5 [shape = 's32[1]{0}', space=sflag, size = 0x4, scoped, tag = 'scoped memory for weighted_cross_entropy_loss.1']
    #allocation6 [shape = 'u8[512]{0}', space=vmem, size = 0x400, scoped, tag = 'output window, operand 1, single buffered']
    #allocation7 [shape = 's32[1]{0}', space=sflag, size = 0x4, scoped, tag = 'scoped memory for weighted_cross_entropy_loss.1']
    %10 = vsyncpa [#allocation5], 0
    %11 = vsyncpa [#allocation7], 0
    // Predicated region
    $region2: #{weighted_cross_entropy_loss.1} parent=1 // pred_check
      _
    $region3: #{weighted_cross_entropy_loss.1} parent=1 // pred_check_branch
      %13 = sbr.rel (0) target = $region5
    $region4: #{weighted_cross_entropy_loss.1} parent=1 // pred_region
      _
    $region5: #{weighted_cross_entropy_loss.1} parent=1 // pred_fallthru
      _
    // Predicated region
    $region6: #{weighted_cross_entropy_loss.1} parent=1 // pred_check
      _
    $region7: #{weighted_cross_entropy_loss.1} parent=1 // pred_check_branch
      %15 = sbr.rel (0) target = $region9
    $region8: #{weighted_cross_entropy_loss.1} parent=1 // pred_region
      %s16 = sadd.s32 0, 0
      %p17 = scmp.lt.s32.totalorder %s16, 0
      %s18 = scalar_select %p17, %s16, 0
      %s19 = smul.u32 4, %s18
      %p20 = scmp.lt.s32.totalorder %s19, 3
      %s21 = scalar_select %p20, %s19, 3
      %s22 = smul.addr %s21, 4
      %s23 = scalar_lea.vmem %s1, %s22
      %s24 = sadd.s32 0, 0
      %p25 = scmp.lt.s32.totalorder %s24, 0
      %s26 = scalar_select %p25, %s24, 0
      %s27 = smul.u32 4, %s26
    $region9: #{weighted_cross_entropy_loss.1} parent=1 // pred_fallthru
      _
    // Predicated region
    $region10: #{weighted_cross_entropy_loss.1} parent=1 // pred_check
      _
    $region11: #{weighted_cross_entropy_loss.1} parent=1 // pred_check_branch
      %29 = sbr.rel (0) target = $region13
    $region12: #{weighted_cross_entropy_loss.1} parent=1 // pred_region
      %s30 = sadd.s32 0, 0
      %p31 = scmp.lt.s32.totalorder %s30, 0
      %s32 = scalar_select %p31, %s30, 0
      %s33 = smul.u32 4, %s32
      %p34 = scmp.lt.s32.totalorder %s33, 3
      %s35 = scalar_select %p34, %s33, 3
      %s36 = scalar_lea.vmem %s2, %s35
      %s37 = sadd.s32 0, 0
      %p38 = scmp.lt.s32.totalorder %s37, 0
      %s39 = scalar_select %p38, %s37, 0
      %s40 = smul.u32 4, %s39
    $region13: #{weighted_cross_entropy_loss.1} parent=1 // pred_fallthru
      _
    %s41 = sadd.s32 0, 0
    %p42 = scmp.lt.s32.totalorder %s41, 0
    %s43 = scalar_select %p42, %s41, 0
    %s44 = smul.u32 4, %s43
    %p45 = scmp.lt.s32.totalorder %s44, 3
    %s46 = scalar_select %p45, %s44, 3
    %s47 = smul.addr %s46, 4
    %s48 = scalar_lea.vmem %s1, %s47
    %s49 = sadd.s32 0, 0
    %p50 = scmp.lt.s32.totalorder %s49, 0
    %s51 = scalar_select %p50, %s49, 0
    %s52 = smul.u32 4, %s51
    %p53 = scmp.lt.s32.totalorder %s52, 3
    %s54 = scalar_select %p53, %s52, 3
    %s55 = scalar_lea.vmem %s2, %s54
    %s56 = sadd.s32 0, 0
    %p57 = scmp.lt.s32.totalorder %s56, 0
    %s58 = scalar_select %p57, %s56, 0
    %s59 = smul.u32 4, %s58
    %p60 = scmp.lt.s32.totalorder %s59, 3
    %s61 = scalar_select %p60, %s59, 3
    %s62 = smul.addr %s61, 4
    %s63 = scalar_lea.vmem %s1, %s62
    %s64 = sadd.s32 0, 0
    %p65 = scmp.lt.s32.totalorder %s64, 0
    %s66 = scalar_select %p65, %s64, 0
    %s67 = smul.u32 4, %s66
    %s68 = sadd.s32 0, 0
    %p69 = scmp.lt.s32.totalorder %s68, 0
    %s70 = scalar_select %p69, %s68, 0
    %s71 = smul.u32 4, %s70
    %p72 = scmp.lt.s32.totalorder %s71, 3
    %s73 = scalar_select %p72, %s71, 3
    %s74 = scalar_lea.vmem %s2, %s73
    %s75 = sadd.s32 0, 0
    %p76 = scmp.lt.s32.totalorder %s75, 0
    %s77 = scalar_select %p76, %s75, 0
    %s78 = smul.u32 4, %s77
    %p79 = scmp.eq.s32.totalorder 0, 0
    // Predicated region
    $region14: #{weighted_cross_entropy_loss.1} parent=1 // pred_check
      %p80 = pneg %p79
    $region15: #{weighted_cross_entropy_loss.1} parent=1 // pred_check_branch
      %82 = sbr.rel (%p80) target = $region17
    $region16: #{weighted_cross_entropy_loss.1} parent=1 // pred_region
      %v83 = vlaneseq
      %vm84 = vcmp.ge.s32.totalorder %v83, 0
      %vm85 = vcmp.lt.s32.totalorder %v83, 512
      %vm86 = vmand %vm84, %vm85
      %87 = vst.msk [vmem:[#allocation2] sm:$0xf] %vm86, 0.0
      %88 = vst.msk [vmem:[#allocation3] sm:$0xf] %vm86, 0.0
    $region17: #{weighted_cross_entropy_loss.1} parent=1 // pred_fallthru
      _
    %s89 = sadd.s32 0, 0
    %s90 = smul.u32 %s89, 512
    %v91 = vlaneseq
    %v92 = vand.u32 %v91, 127
    %v93 = vadd.s32 %v92, 128
    %v94 = vadd.s32 %v92, 256
    %v95 = vadd.s32 %v92, 384
    %v96 = vstv %s90
    %v97 = vadd.s32 %v92, %v96
    %v98 = vadd.s32 %v93, %v96
    %v99 = vadd.s32 %v94, %v96
    %v100 = vadd.s32 %v95, %v96
    %vm101 = vcmp.lt.s32.totalorder %v97, 512
    %vm102 = vcmp.lt.s32.totalorder %v98, 512
    %vm103 = vcmp.lt.s32.totalorder %v99, 512
    %vm104 = vcmp.lt.s32.totalorder %v100, 512
    %v105 = vld [vmem:[%s63] sm:$0x77]
    %v106 = vld [vmem:[%s63 + $0x8] sm:$0x77]
    %v107 = vmax.f32 %v105, -100.0
    %v108 = vmax.f32 %v106, -100.0
    %v109 = vmin.f32 %v107, 100.0
    %v110 = vmin.f32 %v108, 100.0
    %v111 = vsel %vm101, 1, 0
    %v112 = vsel %vm102, 1, 0
    %v113 = vsel %vm103, 1, 0
    %v114 = vsel %vm104, 1, 0
    %vm115 = vcmp.eq.s32.totalorder %v111, 1
    %vm116 = vcmp.eq.s32.totalorder %v112, 1
    %vm117 = vcmp.eq.s32.totalorder %v113, 1
    %vm118 = vcmp.eq.s32.totalorder %v114, 1
    %121 = vst [vmem:[#allocation1] ss:$2 sm:$0xff] %v109
    %s122 = scalar_lea.vmem [#allocation1], 16
    %123 = vst [vmem:[%s122] ss:$2 sm:$0xff] %v110
    %v124 = vld.sshfl [vmem:[#allocation1] sm:$0xff pattern:$0x75316420]
    %v125 = vld.sshfl [vmem:[#allocation1 + $0x8] sm:$0xff pattern:$0x75316420]
    %v126 = vld.sshfl [vmem:[#allocation1 + $0x10] sm:$0xff pattern:$0x75316420]
    %v127 = vld.sshfl [vmem:[#allocation1 + $0x18] sm:$0xff pattern:$0x75316420]
    %v132 = vsel %vm115, %v124, 0.0
    %v133 = vsel %vm116, %v125, 0.0
    %v134 = vsel %vm117, %v126, 0.0
    %v135 = vsel %vm118, %v127, 0.0
    %v136 = vld [vmem:[%s74] sm:$0xf]
    %v137 = vlaneseq
    %v138 = vshrl.u32 %v137, 7
    %v139 = vperm.slane %v136, 0
    %v140 = vperm.slane %v136, 1
    %v141 = vperm.slane %v136, 2
    %v142 = vperm.slane %v136, 3
    %vm143 = vcmp.eq.s32.totalorder %v138, %v139
    %vm144 = vcmp.eq.s32.totalorder %v138, %v140
    %vm145 = vcmp.eq.s32.totalorder %v138, %v141
    %vm146 = vcmp.eq.s32.totalorder %v138, %v142
    %vm147 = vcmask 1042432
    %v148 = vsel %vm147, %v132, -inf
    %v149 = vrot.slane %v148, 4
    %v150 = vmax.f32 %v148, %v149
    %v151 = vrot.slane %v150, 2
    %v152 = vmax.f32 %v150, %v151
    %v153 = vrot.slane %v152, 1
    %v154 = vmax.f32 %v152, %v153
    %v155 = vsel %vm147, %v133, -inf
    %v156 = vrot.slane %v155, 4
    %v157 = vmax.f32 %v155, %v156
    %v158 = vrot.slane %v157, 2
    %v159 = vmax.f32 %v157, %v158
    %v160 = vrot.slane %v159, 1
    %v161 = vmax.f32 %v159, %v160
    %v162 = vsel %vm147, %v134, -inf
    %v163 = vrot.slane %v162, 4
    %v164 = vmax.f32 %v162, %v163
    %v165 = vrot.slane %v164, 2
    %v166 = vmax.f32 %v164, %v165
    %v167 = vrot.slane %v166, 1
    %v168 = vmax.f32 %v166, %v167
    %v169 = vsel %vm147, %v135, -inf
    %v170 = vrot.slane %v169, 4
    %v171 = vmax.f32 %v169, %v170
    %v172 = vrot.slane %v171, 2
    %v173 = vmax.f32 %v171, %v172
    %v174 = vrot.slane %v173, 1
    %v175 = vmax.f32 %v173, %v174
    %v176 = vsub.f32 %v132, %v154
    %v177 = vsub.f32 %v133, %v161
    %v178 = vsub.f32 %v134, %v168
    %v179 = vsub.f32 %v135, %v175
    %v180 = vmul.f32 %v176, 1.442695
    %v181 = vpow.pop %v180
    %v182 = vmul.f32 %v177, 1.442695
    %v183 = vpow.pop %v182
    %v184 = vmul.f32 %v178, 1.442695
    %v185 = vpow.pop %v184
    %v186 = vmul.f32 %v179, 1.442695
    %v187 = vpow.pop %v186
    %v188 = vsel %vm147, %v181, 0.0
    %v189 = vrot.slane %v188, 4
    %v190 = vadd.f32 %v188, %v189
    %v191 = vrot.slane %v190, 2
    %v192 = vadd.f32 %v190, %v191
    %v193 = vrot.slane %v192, 1
    %v194 = vadd.f32 %v192, %v193
    %v195 = vsel %vm147, %v183, 0.0
    %v196 = vrot.slane %v195, 4
    %v197 = vadd.f32 %v195, %v196
    %v198 = vrot.slane %v197, 2
    %v199 = vadd.f32 %v197, %v198
    %v200 = vrot.slane %v199, 1
    %v201 = vadd.f32 %v199, %v200
    %v202 = vsel %vm147, %v185, 0.0
    %v203 = vrot.slane %v202, 4
    %v204 = vadd.f32 %v202, %v203
    %v205 = vrot.slane %v204, 2
    %v206 = vadd.f32 %v204, %v205
    %v207 = vrot.slane %v206, 1
    %v208 = vadd.f32 %v206, %v207
    %v209 = vsel %vm147, %v187, 0.0
    %v210 = vrot.slane %v209, 4
    %v211 = vadd.f32 %v209, %v210
    %v212 = vrot.slane %v211, 2
    %v213 = vadd.f32 %v211, %v212
    %v214 = vrot.slane %v213, 1
    %v215 = vadd.f32 %v213, %v214
    %v216 = vlog2.pop %v194
    %v217 = vmul.f32 %v216, 0.6931472
    %v218 = vlog2.pop %v201
    %v219 = vmul.f32 %v218, 0.6931472
    %v220 = vlog2.pop %v208
    %v221 = vmul.f32 %v220, 0.6931472
    %v222 = vlog2.pop %v215
    %v223 = vmul.f32 %v222, 0.6931472
    %v224 = vadd.f32 %v154, %v217
    %v225 = vadd.f32 %v161, %v219
    %v226 = vadd.f32 %v168, %v221
    %v227 = vadd.f32 %v175, %v223
    %v228 = vsel %vm143, %v132, 0.0
    %v229 = vsel %vm144, %v133, 0.0
    %v230 = vsel %vm145, %v134, 0.0
    %v231 = vsel %vm146, %v135, 0.0
    %v232 = vsel %vm147, %v228, 0.0
    %v233 = vrot.slane %v232, 4
    %v234 = vadd.f32 %v232, %v233
    %v235 = vrot.slane %v234, 2
    %v236 = vadd.f32 %v234, %v235
    %v237 = vrot.slane %v236, 1
    %v238 = vadd.f32 %v236, %v237
    %v239 = vsel %vm147, %v229, 0.0
    %v240 = vrot.slane %v239, 4
    %v241 = vadd.f32 %v239, %v240
    %v242 = vrot.slane %v241, 2
    %v243 = vadd.f32 %v241, %v242
    %v244 = vrot.slane %v243, 1
    %v245 = vadd.f32 %v243, %v244
    %v246 = vsel %vm147, %v230, 0.0
    %v247 = vrot.slane %v246, 4
    %v248 = vadd.f32 %v246, %v247
    %v249 = vrot.slane %v248, 2
    %v250 = vadd.f32 %v248, %v249
    %v251 = vrot.slane %v250, 1
    %v252 = vadd.f32 %v250, %v251
    %v253 = vsel %vm147, %v231, 0.0
    %v254 = vrot.slane %v253, 4
    %v255 = vadd.f32 %v253, %v254
    %v256 = vrot.slane %v255, 2
    %v257 = vadd.f32 %v255, %v256
    %v258 = vrot.slane %v257, 1
    %v259 = vadd.f32 %v257, %v258
    %v260 = vld [vmem:[%s0] sm:$0x7]
    %262 = vset.pattern.permute.xlu0 0
    %263 = vperm.xlu0 %262, %v260
    %v264 = vpop.permute.xlu0 %263
    %v266 = vsel %vm143, %v264, 0.0
    %v267 = vsel %vm144, %v264, 0.0
    %v268 = vsel %vm145, %v264, 0.0
    %v269 = vsel %vm146, %v264, 0.0
    %v270 = vsel %vm147, %v266, 0.0
    %v271 = vrot.slane %v270, 4
    %v272 = vadd.f32 %v270, %v271
    %v273 = vrot.slane %v272, 2
    %v274 = vadd.f32 %v272, %v273
    %v275 = vrot.slane %v274, 1
    %v276 = vadd.f32 %v274, %v275
    %v277 = vsel %vm147, %v267, 0.0
    %v278 = vrot.slane %v277, 4
    %v279 = vadd.f32 %v277, %v278
    %v280 = vrot.slane %v279, 2
    %v281 = vadd.f32 %v279, %v280
    %v282 = vrot.slane %v281, 1
    %v283 = vadd.f32 %v281, %v282
    %v284 = vsel %vm147, %v268, 0.0
    %v285 = vrot.slane %v284, 4
    %v286 = vadd.f32 %v284, %v285
    %v287 = vrot.slane %v286, 2
    %v288 = vadd.f32 %v286, %v287
    %v289 = vrot.slane %v288, 1
    %v290 = vadd.f32 %v288, %v289
    %v291 = vsel %vm147, %v269, 0.0
    %v292 = vrot.slane %v291, 4
    %v293 = vadd.f32 %v291, %v292
    %v294 = vrot.slane %v293, 2
    %v295 = vadd.f32 %v293, %v294
    %v296 = vrot.slane %v295, 1
    %v297 = vadd.f32 %v295, %v296
    %v298 = vsel %vm101, %v276, 0.0
    %v299 = vsel %vm102, %v283, 0.0
    %v300 = vsel %vm103, %v290, 0.0
    %v301 = vsel %vm104, %v297, 0.0
    %v302 = vld [vmem:[#allocation2] sm:$0xf]
    %v303 = vsub.f32 %v224, %v238
    %v304 = vsub.f32 %v225, %v245
    %v305 = vsub.f32 %v226, %v252
    %v306 = vsub.f32 %v227, %v259
    %v307 = vmul.f32 %v298, %v303
    %v308 = vmul.f32 %v299, %v304
    %v309 = vmul.f32 %v300, %v305
    %v310 = vmul.f32 %v301, %v306
    %v315 = vrot.slane %v308, 7
    %v316 = vrot.slane %v309, 6
    %v317 = vrot.slane %v310, 5
    %vm318 = vcmask 1040384
    %v319 = vsel %vm318, %v307, %v315
    %vm320 = vcmask 1042434
    %v321 = vsel %vm320, %v316, %v317
    %vm322 = vcmask 1041408
    %v323 = vsel %vm322, %v319, %v321
    %v325 = vadd.f32 %v302, %v323
    %v326 = vlaneseq
    %vm327 = vcmp.ge.s32.totalorder %v326, 0
    %vm328 = vcmp.lt.s32.totalorder %v326, 512
    %vm329 = vmand %vm327, %vm328
    %330 = vst.msk [vmem:[#allocation2] sm:$0xf] %vm329, %v325
    %v331 = vld [vmem:[#allocation3] sm:$0xf]
    %v336 = vrot.slane %v299, 7
    %v337 = vrot.slane %v300, 6
    %v338 = vrot.slane %v301, 5
    %v339 = vsel %vm318, %v298, %v336
    %v340 = vsel %vm320, %v337, %v338
    %v341 = vsel %vm322, %v339, %v340
    %v343 = vadd.f32 %v331, %v341
    %344 = vst.msk [vmem:[#allocation3] sm:$0xf] %vm329, %v343
    // Predicated region
    $region18: #{weighted_cross_entropy_loss.1} parent=1 // pred_check
      %p345 = pneg %p79
    $region19: #{weighted_cross_entropy_loss.1} parent=1 // pred_check_branch
      %347 = sbr.rel (%p345) target = $region21
    $region20: #{weighted_cross_entropy_loss.1} parent=1 // pred_region
      %v348 = vld [vmem:[#allocation2] sm:$0xf]
      %v350 = vperm.slane %v348, 0
      %v351 = vperm.slane %v348, 1
      %v352 = vperm.slane %v348, 2
      %v353 = vperm.slane %v348, 3
      %v358 = vsel %vm318, %v350, 0.0
      %v359 = vsel %vm318, %v351, 0.0
      %v360 = vadd.f32 %v358, %v359
      %v361 = vsel %vm318, %v352, 0.0
      %v362 = vadd.f32 %v360, %v361
      %v363 = vsel %vm318, %v353, 0.0
      %v364 = vadd.f32 %v362, %v363
      %365 = vadd.xlane.f32.xlu0 %v364
      %v366 = vpop.xlane.xlu0 %365
      %vm367 = vcmask 0
      %368 = vst.msk [vmem:[#allocation4] sm:$0x1] %vm367, %v366
      %v369 = vld [vmem:[#allocation3] sm:$0xf]
      %v371 = vperm.slane %v369, 0
      %v372 = vperm.slane %v369, 1
      %v373 = vperm.slane %v369, 2
      %v374 = vperm.slane %v369, 3
      %v379 = vsel %vm318, %v371, 0.0
      %v380 = vsel %vm318, %v372, 0.0
      %v381 = vadd.f32 %v379, %v380
      %v382 = vsel %vm318, %v373, 0.0
      %v383 = vadd.f32 %v381, %v382
      %v384 = vsel %vm318, %v374, 0.0
      %v385 = vadd.f32 %v383, %v384
      %386 = vadd.xlane.f32.xlu0 %v385
      %v387 = vpop.xlane.xlu0 %386
      %388 = vst.msk [vmem:[#allocation6] sm:$0x1] %vm367, %v387
    $region21: #{weighted_cross_entropy_loss.1} parent=1 // pred_fallthru
      _
    // Predicated region
    $region22: #{weighted_cross_entropy_loss.1} parent=1 // pred_check
      _
    $region23: #{weighted_cross_entropy_loss.1} parent=1 // pred_check_branch
      %390 = sbr.rel (0) target = $region25
    $region24: #{weighted_cross_entropy_loss.1} parent=1 // pred_region
      %392 = vsyncadd [#allocation5], 0
      %s394 = sshll.u32 [#allocation4], 4
      %s395 = int_to_ptr.vmem [resolvable:$true] %s394
      %s396 = sshll.u32 %s3, 4
      %s397 = int_to_ptr.hbm [resolvable:$true] %s396
      %399 = dma.vmem_to_hbm [thread:$0]  %s395, 16, %s397, [#allocation5]
    $region25: #{weighted_cross_entropy_loss.1} parent=1 // pred_fallthru
      _
    // Predicated region
    $region26: #{weighted_cross_entropy_loss.1} parent=1 // pred_check
      _
    $region27: #{weighted_cross_entropy_loss.1} parent=1 // pred_check_branch
      %401 = sbr.rel (0) target = $region29
    $region28: #{weighted_cross_entropy_loss.1} parent=1 // pred_region
      %403 = vsyncadd [#allocation7], 0
      %s405 = sshll.u32 [#allocation6], 4
      %s406 = int_to_ptr.vmem [resolvable:$true] %s405
      %s407 = sshll.u32 %s4, 4
      %s408 = int_to_ptr.hbm [resolvable:$true] %s407
      %410 = dma.vmem_to_hbm [thread:$0]  %s406, 16, %s408, [#allocation7]
    $region29: #{weighted_cross_entropy_loss.1} parent=1 // pred_fallthru
      _
    // Predicated region
    $region30: #{weighted_cross_entropy_loss.1} parent=1 // pred_check
      _
    $region31: #{weighted_cross_entropy_loss.1} parent=1 // pred_check_branch
      %412 = sbr.rel (0) target = $region33
    $region32: #{weighted_cross_entropy_loss.1} parent=1 // pred_region
      %414 = dma.done [#allocation5], 16
    $region33: #{weighted_cross_entropy_loss.1} parent=1 // pred_fallthru
      _
    // Predicated region
    $region34: #{weighted_cross_entropy_loss.1} parent=1 // pred_check
      _
    $region35: #{weighted_cross_entropy_loss.1} parent=1 // pred_check_branch
      %416 = sbr.rel (0) target = $region37
    $region36: #{weighted_cross_entropy_loss.1} parent=1 // pred_region
      %418 = dma.done [#allocation7], 16
    $region37: #{weighted_cross_entropy_loss.1} parent=1 // pred_fallthru
      _
    %419 = vsyncpa [#allocation5], 1
    %420 = vsyncpa [#allocation7], 1

</llo_original>
